<compile_context>
chip_gen: v5e
topology: v5e:2x2
jax: 0.10.0
libtpu: 0.0.40
codegen_flags: <defaults>
</compile_context>

<pallas_src>
import math

import jax
import jax.numpy as jnp
from jax.experimental import pallas as pl
from jax.experimental.pallas import tpu as pltpu


def _round_up(x: int, m: int) -> int:
    return ((x + m - 1) // m) * m


def _pick_tile(total: int, target: int, mult: int, prefer_multi_tiles: bool = False) -> int:
    """Largest multiple of `mult` that divides `total` and is <= target.

    If prefer_multi_tiles, prefer a tile that yields >= 2 grid steps (megacore).
    `total` is assumed to be a positive multiple of `mult`.
    """
    target = max(target, mult)
    cands = [t for t in range(mult, min(target, total) + 1, mult) if total % t == 0]
    if prefer_multi_tiles:
        multi = [t for t in cands if total // t >= 2]
        if multi:
            return multi[-1]
    return cands[-1]


def gcn_block_kernel(adj_ref, fw_ref, b_ref, out_ref, acc_ref):
    """One (row-tile i, col-tile j, reduction-tile k) step of relu(adj @ FW + b)."""
    k = pl.program_id(2)

    @pl.when(k == 0)
    def _init():
        # Seed the f32 accumulator with the bias: removes a (tm, tn) add from the
        # epilogue and the separate zeros fill.
        acc_ref[...] = jnp.broadcast_to(b_ref[...], acc_ref.shape)

    # acc += adj[i, k] @ FW[k, j]  (MXU, f32 accumulation, no in-kernel casts)
    acc_ref[...] += jnp.dot(
        adj_ref[...], fw_ref[...], preferred_element_type=jnp.float32
    )

    @pl.when(k == pl.num_programs(2) - 1)
    def _finalize():
        out_ref[...] = jnp.maximum(acc_ref[...], 0.0).astype(out_ref.dtype)


def graph_convolution_block(adj, feature, weight, bias, *,
                            mxu_dtype=jnp.bfloat16,
                            tm_target=512, tk_target=1024, tn_target=512):
    """relu(adj @ (feature @ weight) + bias) via one tiled Pallas kernel."""
    N, F = feature.shape
    H = weight.shape[1]
    assert adj.shape == (N, N)
    assert weight.shape[0] == F and bias.shape == (H,)

    out_dtype = feature.dtype

    # Padded extents satisfying the (8, 128) BlockSpec rule; tiles are divisors of
    # the padded extents so no extra dead rows/cols beyond alignment are processed.
    Np = _round_up(N, 8)       # adj rows / out rows (sublane-aligned)
    Nk = _round_up(N, 128)     # reduction dim: adj cols / FW rows (lane-aligned)
    Hp = _round_up(H, 128)     # output width (lane-dense stores)

    tm = _pick_tile(Np, tm_target, 8, prefer_multi_tiles=True)   # give both v7x TCs work
    tk = _pick_tile(Nk, tk_target, 128)
    tn = _pick_tile(Hp, tn_target, 128)

    # FW = feature @ W computed ONCE (f32 accumulation), outside the kernel.
    fw = jnp.dot(feature, weight, preferred_element_type=jnp.float32)

    # Cast to the MXU dtype BEFORE padding (pad pass, if any, runs on narrow data);
    # skip padding entirely when shapes are already aligned.  Zero padding is exact:
    # padded adj cols x padded FW rows contribute 0, padded bias cols give relu(0)=0,
    # and all padding is sliced off at the end.
    adj_c = adj.astype(mxu_dtype)
    if (Np, Nk) != (N, N):
        adj_c = jnp.pad(adj_c, ((0, Np - N), (0, Nk - N)))
    fw_c = fw.astype(mxu_dtype)
    if (Nk, Hp) != (N, H):
        fw_c = jnp.pad(fw_c, ((0, Nk - N), (0, Hp - H)))
    b_p = bias.astype(jnp.float32)
    if Hp != H:
        b_p = jnp.pad(b_p, (0, Hp - H))
    b_p = b_p.reshape(1, Hp)

    grid = (Np // tm, Hp // tn, Nk // tk)

    # VMEM budget from the tile arithmetic (double-buffered ins/outs + f32 acc),
    # with per-generation headroom (>=16 MiB) below physical VMEM.
    mxu_itemsize = jnp.dtype(mxu_dtype).itemsize
    out_itemsize = jnp.dtype(out_dtype).itemsize
    vmem_bytes = (
        2 * mxu_itemsize * (tm * tk + tk * tn)   # adj + FW, double-buffered
        + 2 * 4 * tn                             # bias
        + 2 * out_itemsize * tm * tn             # output, double-buffered
        + 4 * tm * tn                            # f32 accumulator scratch
    )
    try:
        vmem_cap = int(pltpu.get_tpu_info().vmem_capacity_bytes)
    except Exception:
        vmem_cap = 64 << 20                      # conservative: v7x per-TC VMEM
    vmem_limit = int(min(vmem_bytes + (16 << 20), vmem_cap - (16 << 20)))
    vmem_limit = max(vmem_limit, 16 << 20)

    cost = pl.CostEstimate(
        flops=2 * N * N * H,                      # kernel does only adj @ FW
        transcendentals=0,
        bytes_accessed=(mxu_itemsize * (Np * Nk + Nk * Hp)
                        + 4 * Hp
                        + out_itemsize * Np * Hp),
    )

    out_p = pl.pallas_call(
        gcn_block_kernel,
        out_shape=jax.ShapeDtypeStruct((Np, Hp), out_dtype),
        grid_spec=pltpu.PrefetchScalarGridSpec(
            num_scalar_prefetch=0,
            grid=grid,
            in_specs=[
                pl.BlockSpec((tm, tk), lambda i, j, k: (i, k)),   # adj tile
                pl.BlockSpec((tk, tn), lambda i, j, k: (k, j)),   # FW tile
                pl.BlockSpec((1, tn), lambda i, j, k: (0, j)),    # bias tile
            ],
            out_specs=pl.BlockSpec((tm, tn), lambda i, j, k: (i, j)),
            scratch_shapes=[pltpu.VMEM((tm, tn), jnp.float32)],
        ),
        compiler_params=pltpu.CompilerParams(
            dimension_semantics=("parallel", "parallel", "arbitrary"),
            vmem_limit_bytes=vmem_limit,
        ),
        cost_estimate=cost,
    )(adj_c, fw_c, b_p)

    return out_p[:N, :H]


if __name__ == "__main__":
    key = jax.random.PRNGKey(0)
    k_adj, k_feat, k_w, k_b = jax.random.split(key, 4)

    # --- Small shapes consistent with the module: N nodes, feature_size F, hidden H.
    N, F, H = 16, 8, 32

    # Parameter init mirroring GraphConvolutionLayer.initialize_parameters:
    # uniform(-stdv, stdv) with stdv = 1/sqrt(kernel_size) (kernel_size == H).
    stdv = 1.0 / math.sqrt(H)
    weight = jax.random.uniform(k_w, (F, H), jnp.float32, minval=-stdv, maxval=stdv)
    bias = jax.random.uniform(k_b, (H,), jnp.float32, minval=-stdv, maxval=stdv)

    # Inputs: dense adjacency (torch.spmm on a dense adj is equivalent) + features.
    adj = jax.random.uniform(k_adj, (N, N), jnp.float32)
    adj = adj / jnp.sum(adj, axis=1, keepdims=True)   # row-normalized
    feature = jax.random.normal(k_feat, (N, F), jnp.float32)

    # Pure-JAX reference.
    ref = jnp.maximum(adj @ (feature @ weight) + bias[None, :], 0.0)

    # 1) Exact-semantics path: f32 MXU inputs, tight tolerance.
    out_f32 = graph_convolution_block(adj, feature, weight, bias,
                                      mxu_dtype=jnp.float32)
    out_f32 = jax.block_until_ready(out_f32)
    assert out_f32.shape == (N, H)
    assert jnp.allclose(out_f32, ref, atol=1e-5, rtol=1e-5)

    # 2) Fast path (default): bf16 adj/FW in HBM+MXU, f32 accumulation.
    out_bf16 = graph_convolution_block(adj, feature, weight, bias,
                                       mxu_dtype=jnp.bfloat16)
    out_bf16 = jax.block_until_ready(out_bf16)
    assert out_bf16.shape == (N, H)
    assert jnp.allclose(out_bf16, ref, atol=3e-2, rtol=3e-2)

    # 3) Multi-tile path (exercises k-accumulation, H padding, j/row tiling) with
    #    f32 MXU for exact comparison.
    N2, F2, H2 = 256, 8, 96
    k2_adj, k2_feat, k2_w, k2_b = jax.random.split(jax.random.PRNGKey(1), 4)
    stdv2 = 1.0 / math.sqrt(H2)
    weight2 = jax.random.uniform(k2_w, (F2, H2), jnp.float32, minval=-stdv2, maxval=stdv2)
    bias2 = jax.random.uniform(k2_b, (H2,), jnp.float32, minval=-stdv2, maxval=stdv2)
    adj2 = jax.random.uniform(k2_adj, (N2, N2), jnp.float32)
    adj2 = adj2 / jnp.sum(adj2, axis=1, keepdims=True)
    feature2 = jax.random.normal(k2_feat, (N2, F2), jnp.float32)
    ref2 = jnp.maximum(adj2 @ (feature2 @ weight2) + bias2[None, :], 0.0)
    out2 = graph_convolution_block(adj2, feature2, weight2, bias2,
                                   mxu_dtype=jnp.float32,
                                   tm_target=128, tk_target=128, tn_target=128)
    out2 = jax.block_until_ready(out2)
    assert out2.shape == (N2, H2)
    assert jnp.allclose(out2, ref2, atol=1e-4, rtol=1e-4)

    print("KERNEL_OK")
</pallas_src>

<mosaic_0001>
module attributes {stable_mosaic.version = 11 : i64} {
  func.func @gcn_block_kernel(%arg0: i32, %arg1: i32, %arg2: i32, %arg3: memref<8x128xf32, #tpu.memory_space<vmem>>, %arg4: memref<128x128xf32, #tpu.memory_space<vmem>>, %arg5: memref<1x128xf32, #tpu.memory_space<vmem>>, %arg6: memref<8x128xf32, #tpu.memory_space<vmem>>, %arg7: memref<8x128xf32, #tpu.memory_space<vmem>>) attributes {dimension_semantics = [#tpu.dimension_semantics<parallel>, #tpu.dimension_semantics<parallel>, #tpu.dimension_semantics<arbitrary>], iteration_bounds = array<i64: 2, 1, 1>, scalar_prefetch = 0 : i64, scratch_operands = 1 : i64, tpu.core_type = #tpu.core_type<tc>, window_params = [{transform_indices = @transform_0, window_bounds = array<i64: 8, 128>}, {transform_indices = @transform_1, window_bounds = array<i64: 128, 128>}, {transform_indices = @transform_2, window_bounds = array<i64: 1, 128>}, {transform_indices = @transform_3, window_bounds = array<i64: 8, 128>}]} {
    %c0_i32 = arith.constant 0 : i32
    %0 = arith.cmpi eq, %arg2, %c0_i32 : i32
    %1 = arith.extui %0 : i1 to i32
    %c0_i32_0 = arith.constant 0 : i32
    %2 = arith.cmpi ne, %1, %c0_i32_0 : i32
    scf.if %2 {
      %c0_10 = arith.constant 0 : index
      %c0_11 = arith.constant 0 : index
      %12 = vector.load %arg5[%c0_10, %c0_11] : memref<1x128xf32, #tpu.memory_space<vmem>>, vector<1x128xf32>
      %13 = vector.shape_cast %12 : vector<1x128xf32> to vector<1x128xf32>
      %14 = vector.broadcast %13 : vector<1x128xf32> to vector<8x128xf32>
      %c0_12 = arith.constant 0 : index
      %c0_13 = arith.constant 0 : index
      %15 = vector.load %arg7[%c0_12, %c0_13] : memref<8x128xf32, #tpu.memory_space<vmem>>, vector<8x128xf32>
      tpu.vector_store %arg7[%c0_12, %c0_13], %14 {strides = array<i32>} : memref<8x128xf32, #tpu.memory_space<vmem>>, vector<8x128xf32>,
    } else {
    }
    %c0 = arith.constant 0 : index
    %c0_1 = arith.constant 0 : index
    %3 = vector.load %arg7[%c0, %c0_1] : memref<8x128xf32, #tpu.memory_space<vmem>>, vector<8x128xf32>
    %c0_2 = arith.constant 0 : index
    %c0_3 = arith.constant 0 : index
    %4 = vector.load %arg3[%c0_2, %c0_3] : memref<8x128xf32, #tpu.memory_space<vmem>>, vector<8x128xf32>
    %c0_4 = arith.constant 0 : index
    %c0_5 = arith.constant 0 : index
    %5 = vector.load %arg4[%c0_4, %c0_5] : memref<128x128xf32, #tpu.memory_space<vmem>>, vector<128x128xf32>
    %cst = arith.constant dense<0.000000e+00> : vector<8x128xf32>
    %6 = tpu.matmul %4, %5, %cst {dimension_numbers = #tpu.dot_dimension_numbers<[1], [0], [0], [1], [0, 0, 1, 1], [], []>} : vector<8x128xf32>, vector<128x128xf32>, vector<8x128xf32> -> vector<8x128xf32>
    %7 = arith.addf %3, %6 : vector<8x128xf32>
    %c0_6 = arith.constant 0 : index
    %c0_7 = arith.constant 0 : index
    %8 = vector.load %arg7[%c0_6, %c0_7] : memref<8x128xf32, #tpu.memory_space<vmem>>, vector<8x128xf32>
    tpu.vector_store %arg7[%c0_6, %c0_7], %7 {strides = array<i32>} : memref<8x128xf32, #tpu.memory_space<vmem>>, vector<8x128xf32>,
    %c0_i32_8 = arith.constant 0 : i32
    %9 = arith.cmpi eq, %arg2, %c0_i32_8 : i32
    %10 = arith.extui %9 : i1 to i32
    %c0_i32_9 = arith.constant 0 : i32
    %11 = arith.cmpi ne, %10, %c0_i32_9 : i32
    scf.if %11 {
      %c0_10 = arith.constant 0 : index
      %c0_11 = arith.constant 0 : index
      %12 = vector.load %arg7[%c0_10, %c0_11] : memref<8x128xf32, #tpu.memory_space<vmem>>, vector<8x128xf32>
      %cst_12 = arith.constant 0.000000e+00 : f32
      %13 = vector.broadcast %cst_12 : f32 to vector<8x128xf32>
      %14 = arith.maximumf %12, %13 : vector<8x128xf32>
      %c0_13 = arith.constant 0 : index
      %c0_14 = arith.constant 0 : index
      %15 = vector.load %arg6[%c0_13, %c0_14] : memref<8x128xf32, #tpu.memory_space<vmem>>, vector<8x128xf32>
      tpu.vector_store %arg6[%c0_13, %c0_14], %14 {strides = array<i32>} : memref<8x128xf32, #tpu.memory_space<vmem>>, vector<8x128xf32>,
    } else {
    }
    return
  }
  func.func @transform_0(%arg0: i32, %arg1: i32, %arg2: i32) -> (i32, i32) {
    %c0_i32 = arith.constant 0 : i32
    return %arg0, %arg2 : i32, i32
  }
  func.func @transform_1(%arg0: i32, %arg1: i32, %arg2: i32) -> (i32, i32) {
    %c0_i32 = arith.constant 0 : i32
    return %arg2, %arg1 : i32, i32
  }
  func.func @transform_2(%arg0: i32, %arg1: i32, %arg2: i32) -> (i32, i32) {
    %c0_i32 = arith.constant 0 : i32
    %c0_i32_0 = arith.constant 0 : i32
    return %c0_i32, %arg1 : i32, i32
  }
  func.func @transform_3(%arg0: i32, %arg1: i32, %arg2: i32) -> (i32, i32) {
    %c0_i32 = arith.constant 0 : i32
    return %arg0, %arg1 : i32, i32
  }
}

</mosaic_0001>

<llo_original>
// kernel: tpu_custom_call.1
$region0: #{tpu_custom_call.1}
  #allocation0 [shape = 'u32[]', space=smem, size = 0x4, offset = 0x4, fixed_abs, tag = 'smem constant byte address 0x4 - core index']
  #allocation1 [shape = 'u32[72,128]{1,0:T(1,128)}', space=vmem, size = 0x9000, scoped, tag = 'internal scratch']
  #allocation2 [shape = 'f32[8,128]{1,0:T(8,128)}', space=vmem, size = 0x1000, scoped, tag = 'scratch operand']
  %s0 = inlined_call_operand.hbm [shape: f32[16,128], index: 0, kind: input, shape index: {}]
  %s1 = inlined_call_operand.hbm [shape: f32[128,128], index: 1, kind: input, shape index: {}]
  %s2 = inlined_call_operand.vmem [shape: f32[1,128], index: 2, kind: input, shape index: {}]
  %s3 = inlined_call_operand.hbm [shape: f32[16,128], index: 3, kind: output, shape index: {}]
  %s4 = sld [smem:[#allocation0]]
  $region61: #{tpu_custom_call.1} parent=0
    _
  %s6 = ssub.s32 1, %s4
  %s7 = scalar_select 0, %s6, %s4
  $region1: #{tpu_custom_call.1} parent=0
    #allocation3 [shape = 'u8[8192]{0}', space=vmem, size = 0x2000, scoped, tag = 'input window, operand 0']
    #allocation4 [shape = 's32[2]{0}', space=sflag, size = 0x8, scoped, tag = 'scoped memory for tpu_custom_call.1']
    #allocation5 [shape = 's32[2]{0}', space=sflag, size = 0x8, scoped, tag = 'scoped memory for tpu_custom_call.1']
    #allocation6 [shape = 'u8[65536]{0}', space=vmem, size = 0x10000, scoped, tag = 'input window, operand 1, single buffered']
    #allocation7 [shape = 's32[1]{0}', space=sflag, size = 0x4, scoped, tag = 'scoped memory for tpu_custom_call.1']
    #allocation8 [shape = 'u8[8192]{0}', space=vmem, size = 0x2000, scoped, tag = 'output window, operand 0']
    %8 = vsyncpa [#allocation4], 0
    %s9 = scalar_lea.sflag [#allocation4], 1
    %10 = vsyncpa %s9, 0
    %11 = vsyncpa [#allocation7], 0
    %12 = vsyncpa [#allocation5], 0
    %s13 = scalar_lea.sflag [#allocation5], 1
    %14 = vsyncpa %s13, 0
    loop: start=0, step=1, limit=4
    $region2: #{tpu_custom_call.1} parent=1 // loop_pre_header
      _
    $region3: #{tpu_custom_call.1} parent=1 // loop_header
      %s16 = sphi 0, %s20
      %p17 = scmp.ge.s32.totalorder %s16, 4
      %s23 = sphi 0, %s42
      %s24 = sphi 0, %s38
      %s25 = sphi 0, %s34
      %s26 = sphi 0, %s23
      %s27 = sphi 0, %s24
      %s28 = sphi 0, %s25
      %s29 = sphi 0, %s26
      %s30 = sphi 0, %s27
      %s31 = sphi 0, %s28
      %s47 = sphi 0, %s49
      %s50 = sphi 0, %s47
      %s51 = sphi 0, %s50
      %s67 = sphi 0, %s51
      %s75 = sphi 0, %s77
      %s78 = sphi 0, %s75
      %s79 = sphi 0, %s78
      %s95 = sphi 0, %s79
      %s101 = sphi 0, %s103
      %s104 = sphi 0, %s101
      %s105 = sphi 0, %s104
      %s121 = sphi 0, %s105
      %s129 = sphi 0, %s131
      %s132 = sphi 0, %s129
      %s133 = sphi 0, %s132
      %s149 = sphi 0, %s133
    $region4: #{tpu_custom_call.1} parent=1 // loop_header_branch
      %19 = sbr.rel (%p17) target = $region8
    $region5: #{tpu_custom_call.1} parent=1 // loop_body
      %s21 = ssub.s32 %s16, 1
      %s22 = ssub.s32 %s16, 2
      %s32 = sadd.s32 1, %s25
      %p33 = scmp.ge.s32.totalorder %s32, 1
      %s34 = scalar_select %p33, 0, %s32
      %s35 = sadd.s32 1, %s24
      %s36 = scalar_select %p33, %s35, %s24
      %p37 = scmp.ge.s32.totalorder %s36, 1
      %s38 = scalar_select %p37, 0, %s36
      %s39 = sadd.s32 1, %s23
      %s40 = scalar_select %p37, %s39, %s23
      %p41 = scmp.ge.s32.totalorder %s40, 2
      %s42 = scalar_select %p41, 0, %s40
      %s43 = ssub.s32 %s23, %s42
      %s44 = ssub.s32 %s25, %s34
      %s45 = sor.u32 %s43, %s44
      %p46 = scmp.eq.s32.totalorder %s45, 0
      %s48 = sadd.s32 %s47, 1
      %s49 = scalar_select %p46, %s47, %s48
      %p52 = pneg %p46
      %p53 = scmp.eq.s32.totalorder %s16, 1
      %p54 = por %p52, %p53
      %p55 = scmp.ne.s32.totalorder %s47, %s50
      %p56 = scmp.eq.s32.totalorder %s16, 0
      %p57 = por %p55, %p56
      %p58 = scmp.ne.s32.totalorder %s47, %s50
      %p59 = scmp.eq.s32.totalorder %s21, 1
      %p60 = por %p58, %p59
      %p61 = scmp.ne.s32.totalorder %s50, %s51
      %p62 = scmp.eq.s32.totalorder %s21, 0
      %p63 = por %p61, %p62
      %p64 = scmp.ne.s32.totalorder %s50, %s51
      %p65 = scmp.eq.s32.totalorder %s22, 1
      %p66 = por %p64, %p65
      %p68 = scmp.ne.s32.totalorder %s51, %s67
      %p69 = scmp.eq.s32.totalorder %s22, 0
      %p70 = por %p68, %p69
      %s71 = ssub.s32 %s25, %s34
      %s72 = ssub.s32 %s24, %s38
      %s73 = sor.u32 %s71, %s72
      %p74 = scmp.eq.s32.totalorder %s73, 0
      %s76 = sadd.s32 %s75, 1
      %s77 = scalar_select %p74, %s75, %s76
      %p80 = pneg %p74
      %p81 = scmp.eq.s32.totalorder %s16, 1
      %p82 = por %p80, %p81
      %p83 = scmp.ne.s32.totalorder %s75, %s78
      %p84 = scmp.eq.s32.totalorder %s16, 0
      %p85 = por %p83, %p84
      %p86 = scmp.ne.s32.totalorder %s75, %s78
      %p87 = scmp.eq.s32.totalorder %s21, 1
      %p88 = por %p86, %p87
      %p89 = scmp.ne.s32.totalorder %s78, %s79
      %p90 = scmp.eq.s32.totalorder %s21, 0
      %p91 = por %p89, %p90
      %p92 = scmp.ne.s32.totalorder %s78, %s79
      %p93 = scmp.eq.s32.totalorder %s22, 1
      %p94 = por %p92, %p93
      %p96 = scmp.ne.s32.totalorder %s79, %s95
      %p97 = scmp.eq.s32.totalorder %s22, 0
      %p98 = por %p96, %p97
      %s99 = ssub.s32 %s24, %s38
      %p100 = scmp.eq.s32.totalorder %s99, 0
      %s102 = sadd.s32 %s101, 1
      %s103 = scalar_select %p100, %s101, %s102
      %p106 = pneg %p100
      %p107 = scmp.eq.s32.totalorder %s16, 1
      %p108 = por %p106, %p107
      %p109 = scmp.ne.s32.totalorder %s101, %s104
      %p110 = scmp.eq.s32.totalorder %s16, 0
      %p111 = por %p109, %p110
      %p112 = scmp.ne.s32.totalorder %s101, %s104
      %p113 = scmp.eq.s32.totalorder %s21, 1
      %p114 = por %p112, %p113
      %p115 = scmp.ne.s32.totalorder %s104, %s105
      %p116 = scmp.eq.s32.totalorder %s21, 0
      %p117 = por %p115, %p116
      %p118 = scmp.ne.s32.totalorder %s104, %s105
      %p119 = scmp.eq.s32.totalorder %s22, 1
      %p120 = por %p118, %p119
      %p122 = scmp.ne.s32.totalorder %s105, %s121
      %p123 = scmp.eq.s32.totalorder %s22, 0
      %p124 = por %p122, %p123
      %s125 = ssub.s32 %s23, %s42
      %s126 = ssub.s32 %s24, %s38
      %s127 = sor.u32 %s125, %s126
      %p128 = scmp.eq.s32.totalorder %s127, 0
      %s130 = sadd.s32 %s129, 1
      %s131 = scalar_select %p128, %s129, %s130
      %p134 = pneg %p128
      %p135 = scmp.eq.s32.totalorder %s16, 1
      %p136 = por %p134, %p135
      %p137 = scmp.ne.s32.totalorder %s129, %s132
      %p138 = scmp.eq.s32.totalorder %s16, 0
      %p139 = por %p137, %p138
      %p140 = scmp.ne.s32.totalorder %s129, %s132
      %p141 = scmp.eq.s32.totalorder %s21, 1
      %p142 = por %p140, %p141
      %p143 = scmp.ne.s32.totalorder %s132, %s133
      %p144 = scmp.eq.s32.totalorder %s21, 0
      %p145 = por %p143, %p144
      %p146 = scmp.ne.s32.totalorder %s132, %s133
      %p147 = scmp.eq.s32.totalorder %s22, 1
      %p148 = por %p146, %p147
      %p150 = scmp.ne.s32.totalorder %s133, %s149
      %p151 = scmp.eq.s32.totalorder %s22, 0
      %p152 = por %p150, %p151
      %p153 = scmp.le.s32.totalorder 1, %s16
      %p154 = scmp.lt.s32.totalorder %s16, 3
      %p155 = pnand %p153, %p154
      %p156 = pneg %p155
      // Predicated region
      $region9: #{tpu_custom_call.1} parent=5 // pred_check
        _
      $region10: #{tpu_custom_call.1} parent=5 // pred_check_branch
        %158 = sbr.rel (%p155) target = $region12
      $region11: #{tpu_custom_call.1} parent=5 // pred_region
        %s159 = ssub.s32 %s16, 1
        // Predicated region
        $region13: #{tpu_custom_call.1} parent=11 // pred_check
          %p160 = pneg %p91
        $region14: #{tpu_custom_call.1} parent=11 // pred_check_branch
          %162 = sbr.rel (%p160) target = $region16
        $region15: #{tpu_custom_call.1} parent=11 // pred_region
          %s163 = smul.u32 16, %s28
          %165 = vsyncadd [#allocation7], 0
          %s166 = sadd.s32 %s27, %s163
          %s167 = smul.addr %s166, 8
          %s168 = scalar_lea.hbm %s1, %s167
          %s169 = sshll.u32 %s168, 4
          %s170 = int_to_ptr.hbm [resolvable:$true] %s169
          %s171 = sshll.u32 [#allocation6], 4
          %s172 = int_to_ptr.vmem [resolvable:$true] %s171
          %177 = dma.hbm_to_vmem [thread:$0]  %s170, 2048, %s172, [#allocation7], 128, 128, 8
        $region16: #{tpu_custom_call.1} parent=11 // pred_fallthru
          _
        // Predicated region
        $region17: #{tpu_custom_call.1} parent=11 // pred_check
          %p178 = pneg %p117
        $region18: #{tpu_custom_call.1} parent=11 // pred_check_branch
          %180 = sbr.rel (%p178) target = $region20
        $region19: #{tpu_custom_call.1} parent=11 // pred_region
          %p181 = scmp.lt.s32.totalorder %s27, 0
          %s182 = scalar_select %p181, %s27, 0
          %s183 = scalar_lea.vmem %s2, %s182
        $region20: #{tpu_custom_call.1} parent=11 // pred_fallthru
          _
      $region12: #{tpu_custom_call.1} parent=5 // pred_fallthru
        _
      %p184 = scmp.lt.s32.totalorder %s16, 2
      // Predicated region
      $region21: #{tpu_custom_call.1} parent=5 // pred_check
        %p185 = pneg %p184
      $region22: #{tpu_custom_call.1} parent=5 // pred_check_branch
        %187 = sbr.rel (%p185) target = $region24
      $region23: #{tpu_custom_call.1} parent=5 // pred_region
        // Predicated region
        $region25: #{tpu_custom_call.1} parent=23 // pred_check
          %p188 = pneg %p57
        $region26: #{tpu_custom_call.1} parent=23 // pred_check_branch
          %190 = sbr.rel (%p188) target = $region28
        $region27: #{tpu_custom_call.1} parent=23 // pred_region
          %s191 = sand.u32 %s47, 1
          %s192 = scalar_lea.sflag [#allocation4], %s191
          %s193 = sand.u32 %s47, 1
          %s194 = smul.addr %s193, 8
          %s195 = scalar_lea.vmem [#allocation3], %s194
          %197 = vsyncadd %s192, 0
          %s198 = sadd.s32 %s25, %s23
          %s199 = smul.addr %s198, 8
          %s200 = scalar_lea.hbm %s0, %s199
          %s202 = sshll.u32 %s200, 4
          %s203 = int_to_ptr.hbm [resolvable:$true] %s202
          %s204 = sshll.u32 %s195, 4
          %s205 = int_to_ptr.vmem [resolvable:$true] %s204
          %207 = dma.hbm_to_vmem [thread:$0]  %s203, 128, %s205, %s192
        $region28: #{tpu_custom_call.1} parent=23 // pred_fallthru
          _
      $region24: #{tpu_custom_call.1} parent=5 // pred_fallthru
        _
      %p208 = scmp.le.s32.totalorder 1, %s16
      %p209 = scmp.lt.s32.totalorder %s16, 3
      %p210 = pnand %p208, %p209
      %p211 = pneg %p210
      // Predicated region
      $region29: #{tpu_custom_call.1} parent=5 // pred_check
        _
      $region30: #{tpu_custom_call.1} parent=5 // pred_check_branch
        %213 = sbr.rel (%p210) target = $region32
      $region31: #{tpu_custom_call.1} parent=5 // pred_region
        %s214 = ssub.s32 %s16, 1
        %s215 = sand.u32 %s50, 1
        %s216 = scalar_lea.sflag [#allocation4], %s215
        %s217 = sand.u32 %s50, 1
        %s218 = smul.addr %s217, 8
        %s219 = scalar_lea.vmem [#allocation3], %s218
        // Predicated region
        $region33: #{tpu_custom_call.1} parent=31 // pred_check
          %p220 = pneg %p63
        $region34: #{tpu_custom_call.1} parent=31 // pred_check_branch
          %222 = sbr.rel (%p220) target = $region36
        $region35: #{tpu_custom_call.1} parent=31 // pred_region
          %224 = dma.done %s216, 128
        $region36: #{tpu_custom_call.1} parent=31 // pred_fallthru
          _
        // Predicated region
        $region37: #{tpu_custom_call.1} parent=31 // pred_check
          %p225 = pneg %p91
        $region38: #{tpu_custom_call.1} parent=31 // pred_check_branch
          %227 = sbr.rel (%p225) target = $region40
        $region39: #{tpu_custom_call.1} parent=31 // pred_region
          %229 = dma.done [#allocation7], 2048
        $region40: #{tpu_custom_call.1} parent=31 // pred_fallthru
          _
        %s230 = sand.u32 %s50, 1
        %s231 = scalar_lea.sflag [#allocation4], %s230
        %s232 = sand.u32 %s50, 1
        %s233 = smul.addr %s232, 8
        %s234 = scalar_lea.vmem [#allocation3], %s233
        %p235 = pneg %p63
        %p236 = pneg %p60
        %p237 = pneg %p91
        %p238 = pneg %p88
        %p239 = scmp.lt.s32.totalorder %s27, 0
        %s240 = scalar_select %p239, %s27, 0
        %s241 = scalar_lea.vmem %s2, %s240
        %p242 = pneg %p117
        %p243 = pneg %p114
        %p244 = pneg %p145
        %p245 = pneg %p142
        %s246 = sand.u32 %s132, 1
        %s247 = scalar_lea.sflag [#allocation5], %s246
        %s248 = sand.u32 %s132, 1
        %s249 = smul.addr %s248, 8
        %s250 = scalar_lea.vmem [#allocation8], %s249
        %s251 = smul.u32 16, %s28
        %p252 = scmp.lt.s32.totalorder %s27, 0
        %s253 = scalar_select %p252, %s27, 0
        %s254 = scalar_lea.vmem %s2, %s253
        %p255 = scmp.eq.s32.totalorder %s28, 0
        // Predicated region
        $region41: #{tpu_custom_call.1} parent=31 // pred_check
          %p256 = pneg %p255
        $region42: #{tpu_custom_call.1} parent=31 // pred_check_branch
          %258 = sbr.rel (%p256) target = $region44
        $region43: #{tpu_custom_call.1} parent=31 // pred_region
          %v259 = vld [vmem:[%s254] sm:$0x1]
          %v261 = vperm.slane %v259, 0
          %263 = vst [vmem:[#allocation2] sm:$0xff] %v261
        $region44: #{tpu_custom_call.1} parent=31 // pred_fallthru
          _
        %v264 = vld [vmem:[#allocation2] sm:$0xff]
        %v265 = vld [vmem:[%s219] sm:$0xff]
        %v266 = vld [vmem:[#allocation6] sm:$0xff]
        %v267 = vld [vmem:[#allocation6 + $0x8] sm:$0xff]
        %v268 = vld [vmem:[#allocation6 + $0x10] sm:$0xff]
        %v269 = vld [vmem:[#allocation6 + $0x18] sm:$0xff]
        %v270 = vld [vmem:[#allocation6 + $0x20] sm:$0xff]
        %v271 = vld [vmem:[#allocation6 + $0x28] sm:$0xff]
        %v272 = vld [vmem:[#allocation6 + $0x30] sm:$0xff]
        %v273 = vld [vmem:[#allocation6 + $0x38] sm:$0xff]
        %v274 = vld [vmem:[#allocation6 + $0x40] sm:$0xff]
        %v275 = vld [vmem:[#allocation6 + $0x48] sm:$0xff]
        %v276 = vld [vmem:[#allocation6 + $0x50] sm:$0xff]
        %v277 = vld [vmem:[#allocation6 + $0x58] sm:$0xff]
        %v278 = vld [vmem:[#allocation6 + $0x60] sm:$0xff]
        %v279 = vld [vmem:[#allocation6 + $0x68] sm:$0xff]
        %v280 = vld [vmem:[#allocation6 + $0x70] sm:$0xff]
        %v281 = vld [vmem:[#allocation6 + $0x78] sm:$0xff]
        %282 = vmatpush.msra.mxu0 %v281
        %283 = vmatpush.msra.mxu0 %v280
        %284 = vmatpush.msra.mxu0 %v279
        %285 = vmatpush.msra.mxu0 %v278
        %286 = vmatpush.msra.mxu0 %v277
        %287 = vmatpush.msra.mxu0 %v276
        %288 = vmatpush.msra.mxu0 %v275
        %289 = vmatpush.msra.mxu0 %v274
        %290 = vmatpush.msra.mxu0 %v273
        %291 = vmatpush.msra.mxu0 %v272
        %292 = vmatpush.msra.mxu0 %v271
        %293 = vmatpush.msra.mxu0 %v270
        %294 = vmatpush.msra.mxu0 %v269
        %295 = vmatpush.msra.mxu0 %v268
        %296 = vmatpush.msra.mxu0 %v267
        %297 = vmatpush.msra.mxu0 %v266
        %298 = vmatmul.f32.gmra.mxu0 %v265
        %v299 = vpop.f32.mrf.mxu0
        %v300 = vadd.f32 0.0, %v299
        %301 = vdwg.mxu0
        %v302 = vadd.f32 %v264, %v300
        %303 = vst [vmem:[#allocation2] sm:$0xff] %v302
        // Predicated region
        $region45: #{tpu_custom_call.1} parent=31 // pred_check
          %p304 = pneg %p255
        $region46: #{tpu_custom_call.1} parent=31 // pred_check_branch
          %306 = sbr.rel (%p304) target = $region48
        $region47: #{tpu_custom_call.1} parent=31 // pred_region
          %v307 = vld [vmem:[#allocation2] sm:$0xff]
          %v308 = vmax.f32 %v307, 0.0
          %309 = vst [vmem:[%s250] sm:$0xff] %v308
        $region48: #{tpu_custom_call.1} parent=31 // pred_fallthru
          _
        %s310 = sand.u32 %s132, 1
        %s311 = scalar_lea.sflag [#allocation5], %s310
        %s312 = sand.u32 %s132, 1
        %s313 = smul.addr %s312, 8
        %s314 = scalar_lea.vmem [#allocation8], %s313
        // Predicated region
        $region49: #{tpu_custom_call.1} parent=31 // pred_check
          %p315 = pneg %p142
        $region50: #{tpu_custom_call.1} parent=31 // pred_check_branch
          %317 = sbr.rel (%p315) target = $region52
        $region51: #{tpu_custom_call.1} parent=31 // pred_region
          %319 = vsyncadd %s311, 0
          %s320 = sadd.s32 %s27, %s26
          %s321 = smul.addr %s320, 8
          %s322 = scalar_lea.hbm %s3, %s321
          %s324 = sshll.u32 %s314, 4
          %s325 = int_to_ptr.vmem [resolvable:$true] %s324
          %s326 = sshll.u32 %s322, 4
          %s327 = int_to_ptr.hbm [resolvable:$true] %s326
          %329 = dma.vmem_to_hbm [thread:$0]  %s325, 128, %s327, %s311
        $region52: #{tpu_custom_call.1} parent=31 // pred_fallthru
          _
      $region32: #{tpu_custom_call.1} parent=5 // pred_fallthru
        _
      %p330 = scmp.le.s32.totalorder 2, %s16
      // Predicated region
      $region53: #{tpu_custom_call.1} parent=5 // pred_check
        %p331 = pneg %p330
      $region54: #{tpu_custom_call.1} parent=5 // pred_check_branch
        %333 = sbr.rel (%p331) target = $region56
      $region55: #{tpu_custom_call.1} parent=5 // pred_region
        %s334 = ssub.s32 %s16, 2
        // Predicated region
        $region57: #{tpu_custom_call.1} parent=55 // pred_check
          %p335 = pneg %p148
        $region58: #{tpu_custom_call.1} parent=55 // pred_check_branch
          %337 = sbr.rel (%p335) target = $region60
        $region59: #{tpu_custom_call.1} parent=55 // pred_region
          %s338 = sand.u32 %s133, 1
          %s339 = scalar_lea.sflag [#allocation5], %s338
          %s340 = sand.u32 %s133, 1
          %s341 = smul.addr %s340, 8
          %s342 = scalar_lea.vmem [#allocation8], %s341
          %344 = dma.done %s339, 128
        $region60: #{tpu_custom_call.1} parent=55 // pred_fallthru
          _
      $region56: #{tpu_custom_call.1} parent=5 // pred_fallthru
        _
    $region6: #{tpu_custom_call.1} parent=1 // loop_footer
      %s20 = sadd.s32 1, %s16
    $region7: #{tpu_custom_call.1} parent=1 // loop_footer_branch
      %15 = sbr.rel target = $region3
    $region8: #{tpu_custom_call.1} parent=1 // loop_exit
      _
    %345 = vsyncpa [#allocation4], 1
    %s346 = scalar_lea.sflag [#allocation4], 1
    %347 = vsyncpa %s346, 1
    %348 = vsyncpa [#allocation7], 1
    %349 = vsyncpa [#allocation5], 1
    %s350 = scalar_lea.sflag [#allocation5], 1
    %351 = vsyncpa %s350, 1

</llo_original>
